<compile_context>
chip_gen: v6e
topology: v6e:2x2x1
jax: 0.10.0
libtpu: 0.0.40
codegen_flags: <defaults>
</compile_context>

<pallas_src>
import jax
import jax.numpy as jnp
from jax.experimental import pallas as pl
from jax.experimental.pallas import tpu as pltpu

# Matmul operand dtype. bf16 is MXU-native on v5e/v6e/v7x; accumulation is
# always f32.  Set to jnp.float32 if bit-exact f32 Linear layers are required.
_COMPUTE_DTYPE = jnp.bfloat16


def _round_up(x, m):
    return ((x + m - 1) // m) * m


def _cdiv(a, b):
    return -(-a // b)


# ---------------------------------------------------------------------------
# Kernels
# ---------------------------------------------------------------------------
def _ffn_kernel_acc(x_ref, w1_ref, b1_ref, w2_ref, b2_ref, o_ref, acc_ref):
    """Variant with an explicit f32 accumulator (output dtype narrower than f32)."""
    h_idx = pl.program_id(1)

    @pl.when(h_idx == 0)
    def _():
        acc_ref[...] = jnp.zeros_like(acc_ref)

    h = jnp.dot(x_ref[...], w1_ref[...], preferred_element_type=jnp.float32)
    h = jnp.maximum(h + b1_ref[...], 0.0)
    acc_ref[...] += jnp.dot(h.astype(w2_ref.dtype), w2_ref[...],
                            preferred_element_type=jnp.float32)

    @pl.when(h_idx == pl.num_programs(1) - 1)
    def _():
        # TODO(synk): training-mode Dropout (pltpu.prng_seed +
        # pltpu.stateful_bernoulli) not implemented; eval mode is identity.
        o_ref[...] = (acc_ref[...] + b2_ref[...]).astype(o_ref.dtype)


def _ffn_kernel_direct(x_ref, w1_ref, b1_ref, w2_ref, b2_ref, o_ref):
    """f32-output variant: accumulate the H reduction directly into the
    resident output block (saves tm*Cp*4 bytes of VMEM + the finalize copy)."""
    h_idx = pl.program_id(1)

    h = jnp.dot(x_ref[...], w1_ref[...], preferred_element_type=jnp.float32)
    h = jnp.maximum(h + b1_ref[...], 0.0)
    part = jnp.dot(h.astype(w2_ref.dtype), w2_ref[...],
                   preferred_element_type=jnp.float32)

    @pl.when(h_idx == 0)
    def _():
        o_ref[...] = (part + b2_ref[...]).astype(o_ref.dtype)

    @pl.when(h_idx != 0)
    def _():
        o_ref[...] = o_ref[...] + part.astype(o_ref.dtype)


# ---------------------------------------------------------------------------
# Chip info / budget-driven tiling
# ---------------------------------------------------------------------------
def _chip_name():
    try:
        name = str(getattr(pltpu.get_tpu_info(), "chip_version", "") or "")
        if name:
            return name.lower()
    except Exception:
        pass
    try:
        return jax.devices()[0].device_kind.lower()
    except Exception:
        return ""


def _vmem_capacity_bytes():
    try:
        return int(pltpu.get_tpu_info().vmem_capacity_bytes)
    except Exception:
        return 64 << 20  # conservative (v7x per-TC)


def _vmem_footprint(tm, th, Cp, in_bytes, out_bytes, use_scratch):
    buf = 2 * (tm * Cp * in_bytes        # x row tile            (double-buffered)
               + Cp * th * in_bytes      # W1 column slab
               + 8 * th * 4              # b1 slice (f32, sublane-padded)
               + th * Cp * in_bytes      # W2 row slab
               + 8 * Cp * 4              # b2
               + tm * Cp * out_bytes)    # output tile
    if use_scratch:
        buf += tm * Cp * 4               # f32 accumulator scratch
    buf += tm * th * (4 + in_bytes)      # materialized h (f32) + compute-dtype copy
    return buf


def _pick_tiles(Mp, Cp, Hp, in_bytes, out_bytes, use_scratch):
    """Budget-driven (tm, th): shrink th first, then tm, until the footprint fits."""
    chip = _chip_name()
    is_v7 = "v7" in chip
    is_v6 = "v6" in chip
    is_v5 = "v5" in chip

    if is_v7:
        budget = 44 << 20                        # 64 MiB/TC; leave compiler headroom
        tm_pref, th_cap = 512, 512               # keep tm>=512; shrink th for VMEM
    elif is_v6:
        budget = 100 << 20                       # 128 MiB physical
        tm_pref = 1024 if Cp <= 2048 else 512    # move past the ~650 fl/B knee
        th_cap = 2048
    elif is_v5:
        budget = 100 << 20
        tm_pref, th_cap = 512, 2048              # 2x headroom over ~240 fl/B knee
    else:
        budget = 44 << 20                        # unknown: assume the tight part
        tm_pref, th_cap = 512, 512

    th_cands = [c for c in (2048, 1024, 512, 256, 128)
                if c <= min(Hp, th_cap) and Hp % c == 0]
    if not th_cands:
        th_cands = [Hp]                          # Hp is a multiple of 128; rare

    tm_cands = []
    for t in (tm_pref, 768, 512, 384, 256, 128, 64, 32, 16, 8):
        t = min(t, Mp)
        if t > 0 and t not in tm_cands:
            tm_cands.append(t)
    tm_cands.sort(reverse=True)

    def _first_fit():
        for tm_c in tm_cands:
            for th_c in th_cands:
                if _vmem_footprint(tm_c, th_c, Cp, in_bytes, out_bytes,
                                   use_scratch) <= budget:
                    return tm_c, th_c
        return tm_cands[-1], th_cands[-1]

    tm, th = _first_fit()

    # v7x has 2 TensorCores: make sure the "parallel" m axis spans both.
    if is_v7 and _cdiv(Mp, tm) < 2 and Mp >= 16:
        tm = _round_up(_cdiv(Mp, 2), 8)

    return tm, th, budget


# ---------------------------------------------------------------------------
# Wrapper
# ---------------------------------------------------------------------------
@jax.jit
def feed_forward(x, w1, b1, w2, b2):
    """GPT FeedForward forward pass (eval-mode dropout).  x: (B, T, C).
    Weights transposed vs nn.Linear: w1:(C,4C) b1:(1,4C) w2:(4C,C) b2:(1,C)."""
    B, T, C = x.shape
    H = w1.shape[1]                      # 4*C
    M = B * T

    # Pad to TPU-friendly sizes: last dims to 128 lanes, rows to 8 sublanes.
    Cp = _round_up(C, 128)
    Hp = _round_up(H, 128)
    Mp = _round_up(M, 8)

    out_dtype = x.dtype
    use_scratch = out_dtype != jnp.float32       # f32 outputs accumulate in place
    in_bytes = jnp.dtype(_COMPUTE_DTYPE).itemsize
    out_bytes = jnp.dtype(out_dtype).itemsize

    tm, th, budget = _pick_tiles(Mp, Cp, Hp, in_bytes, out_bytes, use_scratch)
    grid = (_cdiv(Mp, tm), _cdiv(Hp, th))
    grid_m = grid[0]

    # Zero-padding is exact for this op: padded x cols hit padded (zero) W1
    # rows, padded hidden units are ReLU(0+0)=0, padded output cols are sliced.
    x2 = jnp.pad(x.reshape(M, C), ((0, Mp - M), (0, Cp - C))).astype(_COMPUTE_DTYPE)
    w1p = jnp.pad(w1, ((0, Cp - C), (0, Hp - H))).astype(_COMPUTE_DTYPE)
    b1p = jnp.pad(b1, ((0, 0), (0, Hp - H))).astype(jnp.float32)
    w2p = jnp.pad(w2, ((0, Hp - H), (0, Cp - C))).astype(_COMPUTE_DTYPE)
    b2p = jnp.pad(b2, ((0, 0), (0, Cp - C))).astype(jnp.float32)

    # Same budget drives the tiles and the scoped-VMEM limit.
    vmem_cap = _vmem_capacity_bytes()
    vmem_limit = int(max(32 << 20, min(budget + (16 << 20), (vmem_cap * 9) // 10)))

    # Weights are re-streamed once per m tile; count that in bytes_accessed.
    cost = pl.CostEstimate(
        flops=4 * Mp * Cp * Hp,                               # two matmuls
        transcendentals=0,
        bytes_accessed=(grid_m * 2 * Cp * Hp * in_bytes       # W1 + W2 re-streams
                        + Mp * Cp * in_bytes                  # x read once
                        + Mp * Cp * out_bytes                 # output write
                        + grid_m * (Hp + Cp) * 4))            # biases

    kernel = _ffn_kernel_acc if use_scratch else _ffn_kernel_direct
    scratch = [pltpu.VMEM((tm, Cp), jnp.float32)] if use_scratch else []

    out = pl.pallas_call(
        kernel,
        out_shape=jax.ShapeDtypeStruct((Mp, Cp), out_dtype),
        grid_spec=pltpu.PrefetchScalarGridSpec(
            num_scalar_prefetch=0,
            grid=grid,
            in_specs=[
                pl.BlockSpec((tm, Cp), lambda i, h: (i, 0)),   # x row tile
                pl.BlockSpec((Cp, th), lambda i, h: (0, h)),   # W1 column slab
                pl.BlockSpec((1, th), lambda i, h: (0, h)),    # b1 slice
                pl.BlockSpec((th, Cp), lambda i, h: (h, 0)),   # W2 row slab
                pl.BlockSpec((1, Cp), lambda i, h: (0, 0)),    # b2
            ],
            out_specs=pl.BlockSpec((tm, Cp), lambda i, h: (i, 0)),
            scratch_shapes=scratch,
        ),
        compiler_params=pltpu.CompilerParams(
            dimension_semantics=("parallel", "arbitrary"),
            vmem_limit_bytes=vmem_limit),
        cost_estimate=cost,
    )(x2, w1p, b1p, w2p, b2p)

    return out[:M, :C].reshape(B, T, C)


def init_params(key, in_feat, dtype=jnp.float32):
    """Deterministic params matching nn.Linear shapes (stored transposed)."""
    k1, k2, k3, k4 = jax.random.split(key, 4)
    hid = 4 * in_feat
    lim1 = 1.0 / jnp.sqrt(in_feat)
    lim2 = 1.0 / jnp.sqrt(hid)
    w1 = jax.random.uniform(k1, (in_feat, hid), dtype, -lim1, lim1)   # = W1_pt.T
    b1 = jax.random.uniform(k2, (1, hid), dtype, -lim1, lim1)
    w2 = jax.random.uniform(k3, (hid, in_feat), dtype, -lim2, lim2)   # = W2_pt.T
    b2 = jax.random.uniform(k4, (1, in_feat), dtype, -lim2, lim2)
    return w1, b1, w2, b2


if __name__ == "__main__":
    key = jax.random.PRNGKey(0)
    B, T, C = 2, 8, 32          # batch=2, seq=8, in_feat=32 (hidden = 128)

    kx, kp = jax.random.split(key)
    x = jax.random.normal(kx, (B, T, C), dtype=jnp.float32)
    w1, b1, w2, b2 = init_params(kp, C)

    y = jax.block_until_ready(feed_forward(x, w1, b1, w2, b2))

    # Reference in plain f32 JAX (eval-mode dropout == identity).  Tolerance
    # loosened because the kernel runs bf16 matmuls with f32 accumulation.
    ref = jnp.maximum(x.reshape(-1, C) @ w1 + b1, 0.0) @ w2 + b2
    ref = ref.reshape(B, T, C)
    assert jnp.allclose(y, ref, atol=5e-2, rtol=5e-2), "mismatch vs reference"

    print("KERNEL_OK")
</pallas_src>

<mosaic_0001>
module attributes {stable_mosaic.version = 11 : i64} {
  func.func @_ffn_kernel_direct(%arg0: i32, %arg1: i32, %arg2: memref<16x128xbf16, #tpu.memory_space<vmem>>, %arg3: memref<128x128xbf16, #tpu.memory_space<vmem>>, %arg4: memref<1x128xf32, #tpu.memory_space<vmem>>, %arg5: memref<128x128xbf16, #tpu.memory_space<vmem>>, %arg6: memref<1x128xf32, #tpu.memory_space<vmem>>, %arg7: memref<16x128xf32, #tpu.memory_space<vmem>>) attributes {dimension_semantics = [#tpu.dimension_semantics<parallel>, #tpu.dimension_semantics<arbitrary>], iteration_bounds = array<i64: 1, 1>, scalar_prefetch = 0 : i64, scratch_operands = 0 : i64, tpu.core_type = #tpu.core_type<tc>, window_params = [{transform_indices = @transform_0, window_bounds = array<i64: 16, 128>}, {transform_indices = @transform_1, window_bounds = array<i64: 128, 128>}, {transform_indices = @transform_2, window_bounds = array<i64: 1, 128>}, {transform_indices = @transform_3, window_bounds = array<i64: 128, 128>}, {pipeline_mode = #tpu.pipeline_mode<synchronous>, transform_indices = @transform_4, window_bounds = array<i64: 1, 128>}, {transform_indices = @transform_5, window_bounds = array<i64: 16, 128>}]} {
    %c0 = arith.constant 0 : index
    %c0_0 = arith.constant 0 : index
    %0 = vector.load %arg2[%c0, %c0_0] : memref<16x128xbf16, #tpu.memory_space<vmem>>, vector<16x128xbf16>
    %c0_1 = arith.constant 0 : index
    %c0_2 = arith.constant 0 : index
    %1 = vector.load %arg3[%c0_1, %c0_2] : memref<128x128xbf16, #tpu.memory_space<vmem>>, vector<128x128xbf16>
    %cst = arith.constant dense<0.000000e+00> : vector<16x128xf32>
    %2 = tpu.matmul %0, %1, %cst {dimension_numbers = #tpu.dot_dimension_numbers<[1], [0], [0], [1], [0, 0, 1, 1], [], []>} : vector<16x128xbf16>, vector<128x128xbf16>, vector<16x128xf32> -> vector<16x128xf32>
    %c0_3 = arith.constant 0 : index
    %c0_4 = arith.constant 0 : index
    %3 = vector.load %arg4[%c0_3, %c0_4] : memref<1x128xf32, #tpu.memory_space<vmem>>, vector<1x128xf32>
    %4 = vector.broadcast %3 : vector<1x128xf32> to vector<16x128xf32>
    %5 = arith.addf %2, %4 : vector<16x128xf32>
    %cst_5 = arith.constant 0.000000e+00 : f32
    %6 = vector.broadcast %cst_5 : f32 to vector<16x128xf32>
    %7 = arith.maximumf %5, %6 : vector<16x128xf32>
    %8 = arith.truncf %7 : vector<16x128xf32> to vector<16x128xbf16>
    %c0_6 = arith.constant 0 : index
    %c0_7 = arith.constant 0 : index
    %9 = vector.load %arg5[%c0_6, %c0_7] : memref<128x128xbf16, #tpu.memory_space<vmem>>, vector<128x128xbf16>
    %cst_8 = arith.constant dense<0.000000e+00> : vector<16x128xf32>
    %10 = tpu.matmul %8, %9, %cst_8 {dimension_numbers = #tpu.dot_dimension_numbers<[1], [0], [0], [1], [0, 0, 1, 1], [], []>} : vector<16x128xbf16>, vector<128x128xbf16>, vector<16x128xf32> -> vector<16x128xf32>
    %c0_i32 = arith.constant 0 : i32
    %11 = arith.cmpi eq, %arg1, %c0_i32 : i32
    %12 = arith.extui %11 : i1 to i32
    %c0_i32_9 = arith.constant 0 : i32
    %13 = arith.cmpi ne, %12, %c0_i32_9 : i32
    scf.if %13 {
      %c0_12 = arith.constant 0 : index
      %c0_13 = arith.constant 0 : index
      %17 = vector.load %arg6[%c0_12, %c0_13] : memref<1x128xf32, #tpu.memory_space<vmem>>, vector<1x128xf32>
      %18 = vector.broadcast %17 : vector<1x128xf32> to vector<16x128xf32>
      %19 = arith.addf %10, %18 : vector<16x128xf32>
      %c0_14 = arith.constant 0 : index
      %c0_15 = arith.constant 0 : index
      %20 = vector.load %arg7[%c0_14, %c0_15] : memref<16x128xf32, #tpu.memory_space<vmem>>, vector<16x128xf32>
      tpu.vector_store %arg7[%c0_14, %c0_15], %19 {strides = array<i32>} : memref<16x128xf32, #tpu.memory_space<vmem>>, vector<16x128xf32>,
    } else {
    }
    %c0_i32_10 = arith.constant 0 : i32
    %14 = arith.cmpi ne, %arg1, %c0_i32_10 : i32
    %15 = arith.extui %14 : i1 to i32
    %c0_i32_11 = arith.constant 0 : i32
    %16 = arith.cmpi ne, %15, %c0_i32_11 : i32
    scf.if %16 {
      %c0_12 = arith.constant 0 : index
      %c0_13 = arith.constant 0 : index
      %17 = vector.load %arg7[%c0_12, %c0_13] : memref<16x128xf32, #tpu.memory_space<vmem>>, vector<16x128xf32>
      %18 = arith.addf %17, %10 : vector<16x128xf32>
      %c0_14 = arith.constant 0 : index
      %c0_15 = arith.constant 0 : index
      %19 = vector.load %arg7[%c0_14, %c0_15] : memref<16x128xf32, #tpu.memory_space<vmem>>, vector<16x128xf32>
      tpu.vector_store %arg7[%c0_14, %c0_15], %18 {strides = array<i32>} : memref<16x128xf32, #tpu.memory_space<vmem>>, vector<16x128xf32>,
    } else {
    }
    return
  }
  func.func @transform_0(%arg0: i32, %arg1: i32) -> (i32, i32) {
    %c0_i32 = arith.constant 0 : i32
    %c0_i32_0 = arith.constant 0 : i32
    return %arg0, %c0_i32 : i32, i32
  }
  func.func @transform_1(%arg0: i32, %arg1: i32) -> (i32, i32) {
    %c0_i32 = arith.constant 0 : i32
    %c0_i32_0 = arith.constant 0 : i32
    return %c0_i32, %arg1 : i32, i32
  }
  func.func @transform_2(%arg0: i32, %arg1: i32) -> (i32, i32) {
    %c0_i32 = arith.constant 0 : i32
    %c0_i32_0 = arith.constant 0 : i32
    return %c0_i32, %arg1 : i32, i32
  }
  func.func @transform_3(%arg0: i32, %arg1: i32) -> (i32, i32) {
    %c0_i32 = arith.constant 0 : i32
    %c0_i32_0 = arith.constant 0 : i32
    return %arg1, %c0_i32 : i32, i32
  }
  func.func @transform_4(%arg0: i32, %arg1: i32) -> (i32, i32) {
    %c0_i32 = arith.constant 0 : i32
    %c0_i32_0 = arith.constant 0 : i32
    %c0_i32_1 = arith.constant 0 : i32
    return %c0_i32, %c0_i32_0 : i32, i32
  }
  func.func @transform_5(%arg0: i32, %arg1: i32) -> (i32, i32) {
    %c0_i32 = arith.constant 0 : i32
    %c0_i32_0 = arith.constant 0 : i32
    return %arg0, %c0_i32 : i32, i32
  }
}

</mosaic_0001>

<llo_original>
// kernel: feed_forward.1
$region0: #{feed_forward.1}
  #allocation0 [shape = 'u32[]', space=smem, size = 0x4, offset = 0x4, fixed_abs, tag = 'smem constant byte address 0x4 - core index']
  #allocation1 [shape = 'u32[144,128]{1,0:T(1,128)}', space=vmem, size = 0x12000, scoped, tag = 'internal scratch']
  %s0 = inlined_call_operand.vmem [shape: bf16[16,128], index: 0, kind: input, shape index: {}]
  %s1 = inlined_call_operand.vmem [shape: bf16[128,128], index: 1, kind: input, shape index: {}]
  %s2 = inlined_call_operand.vmem [shape: f32[1,128], index: 2, kind: input, shape index: {}]
  %s3 = inlined_call_operand.vmem [shape: bf16[128,128], index: 3, kind: input, shape index: {}]
  %s4 = inlined_call_operand.vmem [shape: f32[1,128], index: 4, kind: input, shape index: {}]
  %s5 = inlined_call_operand.vmem [shape: f32[16,128], index: 5, kind: output, shape index: {}]
  %s6 = sld [smem:[#allocation0]]
  $region38: #{feed_forward.1} parent=0
    _
  %s8 = ssub.s32 1, %s6
  %s9 = scalar_select 0, %s8, %s6
  // Predicated region
  $region2: #{feed_forward.1} parent=0 // pred_check
    _
  $region3: #{feed_forward.1} parent=0 // pred_check_branch
    %11 = sbr.rel (0) target = $region5
  $region4: #{feed_forward.1} parent=0 // pred_region
    _
  $region5: #{feed_forward.1} parent=0 // pred_fallthru
    _
  // Predicated region
  $region6: #{feed_forward.1} parent=0 // pred_check
    _
  $region7: #{feed_forward.1} parent=0 // pred_check_branch
    %13 = sbr.rel (0) target = $region9
  $region8: #{feed_forward.1} parent=0 // pred_region
    _
  $region9: #{feed_forward.1} parent=0 // pred_fallthru
    _
  // Predicated region
  $region10: #{feed_forward.1} parent=0 // pred_check
    _
  $region11: #{feed_forward.1} parent=0 // pred_check_branch
    %15 = sbr.rel (0) target = $region13
  $region12: #{feed_forward.1} parent=0 // pred_region
    _
  $region13: #{feed_forward.1} parent=0 // pred_fallthru
    _
  // Predicated region
  $region14: #{feed_forward.1} parent=0 // pred_check
    _
  $region15: #{feed_forward.1} parent=0 // pred_check_branch
    %17 = sbr.rel (0) target = $region17
  $region16: #{feed_forward.1} parent=0 // pred_region
    _
  $region17: #{feed_forward.1} parent=0 // pred_fallthru
    _
  // Predicated region
  $region18: #{feed_forward.1} parent=0 // pred_check
    _
  $region19: #{feed_forward.1} parent=0 // pred_check_branch
    %19 = sbr.rel (0) target = $region21
  $region20: #{feed_forward.1} parent=0 // pred_region
    _
  $region21: #{feed_forward.1} parent=0 // pred_fallthru
    _
  %v21 = vld [vmem:[%s0] sm:$0xf]
  %v22 = vld [vmem:[%s0 + $0x4] sm:$0xf]
  %v23 = vld [vmem:[%s1] sm:$0xf]
  %v24 = vld [vmem:[%s1 + $0x4] sm:$0xf]
  %v25 = vld [vmem:[%s1 + $0x8] sm:$0xf]
  %v26 = vld [vmem:[%s1 + $0xc] sm:$0xf]
  %v27 = vld [vmem:[%s1 + $0x10] sm:$0xf]
  %v28 = vld [vmem:[%s1 + $0x14] sm:$0xf]
  %v29 = vld [vmem:[%s1 + $0x18] sm:$0xf]
  %v30 = vld [vmem:[%s1 + $0x1c] sm:$0xf]
  %v31 = vld [vmem:[%s1 + $0x20] sm:$0xf]
  %v32 = vld [vmem:[%s1 + $0x24] sm:$0xf]
  %v33 = vld [vmem:[%s1 + $0x28] sm:$0xf]
  %v34 = vld [vmem:[%s1 + $0x2c] sm:$0xf]
  %v35 = vld [vmem:[%s1 + $0x30] sm:$0xf]
  %v36 = vld [vmem:[%s1 + $0x34] sm:$0xf]
  %v37 = vld [vmem:[%s1 + $0x38] sm:$0xf]
  %v38 = vld [vmem:[%s1 + $0x3c] sm:$0xf]
  %v39 = vld [vmem:[%s2] sm:$0x1]
  %v41 = vlaneseq
  %v42 = vshrl.u32 %v41, 7
  %v43 = vsub.s32 0, %v42
  %v44 = vrot.slane %v39, %v43
  %v48 = vunpack.c.l.b16 %v21
  %v49 = vunpack.c.l.b16 %v22
  %v50 = vpack.c.b16 %v49, %v48
  %v68 = vunpack.c.l.b16 %v23
  %v69 = vunpack.c.l.b16 %v24
  %v70 = vunpack.c.l.b16 %v25
  %v71 = vunpack.c.l.b16 %v26
  %v72 = vunpack.c.l.b16 %v27
  %v73 = vunpack.c.l.b16 %v28
  %v74 = vunpack.c.l.b16 %v29
  %v75 = vunpack.c.l.b16 %v30
  %v76 = vunpack.c.l.b16 %v31
  %v77 = vunpack.c.l.b16 %v32
  %v78 = vunpack.c.l.b16 %v33
  %v79 = vunpack.c.l.b16 %v34
  %v80 = vunpack.c.l.b16 %v35
  %v81 = vunpack.c.l.b16 %v36
  %v82 = vunpack.c.l.b16 %v37
  %v83 = vunpack.c.l.b16 %v38
  %v84 = vpack.c.b16 %v69, %v68
  %v85 = vpack.c.b16 %v71, %v70
  %v86 = vpack.c.b16 %v73, %v72
  %v87 = vpack.c.b16 %v75, %v74
  %v88 = vpack.c.b16 %v77, %v76
  %v89 = vpack.c.b16 %v79, %v78
  %v90 = vpack.c.b16 %v81, %v80
  %v91 = vpack.c.b16 %v83, %v82
  %100 = vmatprep.subr.bf16.mxu0 0
  %101 = vmatpush1.bf16.msra.mxu0 %v91
  %102 = vmatprep.subr.bf16.mxu0 0
  %103 = vmatpush1.bf16.msra.mxu0 %v90
  %104 = vmatprep.subr.bf16.mxu0 0
  %105 = vmatpush1.bf16.msra.mxu0 %v89
  %106 = vmatprep.subr.bf16.mxu0 0
  %107 = vmatpush1.bf16.msra.mxu0 %v88
  %108 = vmatprep.subr.bf16.mxu0 0
  %109 = vmatpush1.bf16.msra.mxu0 %v87
  %110 = vmatprep.subr.bf16.mxu0 0
  %111 = vmatpush1.bf16.msra.mxu0 %v86
  %112 = vmatprep.subr.bf16.mxu0 0
  %113 = vmatpush1.bf16.msra.mxu0 %v85
  %114 = vmatprep.subr.bf16.mxu0 0
  %115 = vmatpush1.bf16.msra.mxu0 %v84
  %116 = vmatprep.subr.bf16.mxu0 0
  %117 = vmatpush2.bf16.msra.mxu0 0
  %118 = vmatprep.subr.bf16.mxu0 0
  %119 = vmatpush2.bf16.msra.mxu0 0
  %120 = vmatprep.subr.bf16.mxu0 0
  %121 = vmatpush2.bf16.msra.mxu0 0
  %122 = vmatprep.subr.bf16.mxu0 0
  %123 = vmatpush2.bf16.msra.mxu0 0
  %124 = vmatprep.subr.bf16.mxu0 0
  %125 = vmatpush2.bf16.msra.mxu0 0
  %126 = vmatprep.subr.bf16.mxu0 0
  %127 = vmatpush2.bf16.msra.mxu0 0
  %128 = vmatprep.subr.bf16.mxu0 0
  %129 = vmatpush2.bf16.msra.mxu0 0
  %130 = vmatprep.subr.bf16.mxu0 0
  %131 = vmatpush2.bf16.msra.mxu0 0
  %132 = vmatprep.mubr.bf16.mxu0 0
  %133 = vmatmul.mubr.bf16.gmra.mxu0 %v50
  %v134 = vpop.f32.mrf.mxu0
  %v135 = vadd.f32 %v44, %v134
  %v136 = vpop.f32.mrf.mxu0
  %v137 = vpop.f32.mrf.mxu0
  %v138 = vadd.f32 %v44, %v137
  %v139 = vpop.f32.mrf.mxu0
  %140 = vdwg.mxu0
  %v141 = vmax.f32 %v135, 0.0
  %v142 = vmax.f32 %v138, 0.0
  %v143 = vpack.c.bf16 %v142, %v141
  %v144 = vld [vmem:[%s3] sm:$0xf]
  %v145 = vld [vmem:[%s3 + $0x4] sm:$0xf]
  %v146 = vld [vmem:[%s3 + $0x8] sm:$0xf]
  %v147 = vld [vmem:[%s3 + $0xc] sm:$0xf]
  %v148 = vld [vmem:[%s3 + $0x10] sm:$0xf]
  %v149 = vld [vmem:[%s3 + $0x14] sm:$0xf]
  %v150 = vld [vmem:[%s3 + $0x18] sm:$0xf]
  %v151 = vld [vmem:[%s3 + $0x1c] sm:$0xf]
  %v152 = vld [vmem:[%s3 + $0x20] sm:$0xf]
  %v153 = vld [vmem:[%s3 + $0x24] sm:$0xf]
  %v154 = vld [vmem:[%s3 + $0x28] sm:$0xf]
  %v155 = vld [vmem:[%s3 + $0x2c] sm:$0xf]
  %v156 = vld [vmem:[%s3 + $0x30] sm:$0xf]
  %v157 = vld [vmem:[%s3 + $0x34] sm:$0xf]
  %v158 = vld [vmem:[%s3 + $0x38] sm:$0xf]
  %v159 = vld [vmem:[%s3 + $0x3c] sm:$0xf]
  %v176 = vunpack.c.l.b16 %v144
  %v177 = vunpack.c.l.b16 %v145
  %v178 = vunpack.c.l.b16 %v146
  %v179 = vunpack.c.l.b16 %v147
  %v180 = vunpack.c.l.b16 %v148
  %v181 = vunpack.c.l.b16 %v149
  %v182 = vunpack.c.l.b16 %v150
  %v183 = vunpack.c.l.b16 %v151
  %v184 = vunpack.c.l.b16 %v152
  %v185 = vunpack.c.l.b16 %v153
  %v186 = vunpack.c.l.b16 %v154
  %v187 = vunpack.c.l.b16 %v155
  %v188 = vunpack.c.l.b16 %v156
  %v189 = vunpack.c.l.b16 %v157
  %v190 = vunpack.c.l.b16 %v158
  %v191 = vunpack.c.l.b16 %v159
  %v192 = vpack.c.b16 %v177, %v176
  %v193 = vpack.c.b16 %v179, %v178
  %v194 = vpack.c.b16 %v181, %v180
  %v195 = vpack.c.b16 %v183, %v182
  %v196 = vpack.c.b16 %v185, %v184
  %v197 = vpack.c.b16 %v187, %v186
  %v198 = vpack.c.b16 %v189, %v188
  %v199 = vpack.c.b16 %v191, %v190
  %208 = vmatprep.subr.bf16.mxu0 0
  %209 = vmatpush1.bf16.msra.mxu0 %v199
  %210 = vmatprep.subr.bf16.mxu0 0
  %211 = vmatpush1.bf16.msra.mxu0 %v198
  %212 = vmatprep.subr.bf16.mxu0 0
  %213 = vmatpush1.bf16.msra.mxu0 %v197
  %214 = vmatprep.subr.bf16.mxu0 0
  %215 = vmatpush1.bf16.msra.mxu0 %v196
  %216 = vmatprep.subr.bf16.mxu0 0
  %217 = vmatpush1.bf16.msra.mxu0 %v195
  %218 = vmatprep.subr.bf16.mxu0 0
  %219 = vmatpush1.bf16.msra.mxu0 %v194
  %220 = vmatprep.subr.bf16.mxu0 0
  %221 = vmatpush1.bf16.msra.mxu0 %v193
  %222 = vmatprep.subr.bf16.mxu0 0
  %223 = vmatpush1.bf16.msra.mxu0 %v192
  %224 = vmatprep.subr.bf16.mxu0 0
  %225 = vmatpush2.bf16.msra.mxu0 0
  %226 = vmatprep.subr.bf16.mxu0 0
  %227 = vmatpush2.bf16.msra.mxu0 0
  %228 = vmatprep.subr.bf16.mxu0 0
  %229 = vmatpush2.bf16.msra.mxu0 0
  %230 = vmatprep.subr.bf16.mxu0 0
  %231 = vmatpush2.bf16.msra.mxu0 0
  %232 = vmatprep.subr.bf16.mxu0 0
  %233 = vmatpush2.bf16.msra.mxu0 0
  %234 = vmatprep.subr.bf16.mxu0 0
  %235 = vmatpush2.bf16.msra.mxu0 0
  %236 = vmatprep.subr.bf16.mxu0 0
  %237 = vmatpush2.bf16.msra.mxu0 0
  %238 = vmatprep.subr.bf16.mxu0 0
  %239 = vmatpush2.bf16.msra.mxu0 0
  %240 = vmatprep.mubr.bf16.mxu0 0
  %241 = vmatmul.mubr.bf16.gmra.mxu0 %v143
  %v242 = vpop.f32.mrf.mxu0
  %v243 = vadd.f32 0.0, %v242
  %v244 = vpop.f32.mrf.mxu0
  %v245 = vpop.f32.mrf.mxu0
  %v246 = vadd.f32 0.0, %v245
  %v247 = vpop.f32.mrf.mxu0
  %248 = vdwg.mxu0
  %p249 = scmp.eq.s32.totalorder 0, 0
  // Predicated region
  $region22: #{feed_forward.1} parent=0 // pred_check
    %p250 = pneg %p249
  $region23: #{feed_forward.1} parent=0 // pred_check_branch
    %252 = sbr.rel (%p250) target = $region25
  $region24: #{feed_forward.1} parent=0 // pred_region
    %v253 = vld [vmem:[%s4] sm:$0x1]
    %v255 = vlaneseq
    %v256 = vshrl.u32 %v255, 7
    %v257 = vsub.s32 0, %v256
    %v258 = vrot.slane %v253, %v257
    %v260 = vadd.f32 %v243, %v258
    %v261 = vadd.f32 %v246, %v258
    %262 = vst [vmem:[%s5] sm:$0xff] %v260
    %263 = vst [vmem:[%s5 + $0x8] sm:$0xff] %v261
  $region25: #{feed_forward.1} parent=0 // pred_fallthru
    _
  %p264 = scmp.ne.s32.totalorder 0, 0
  // Predicated region
  $region26: #{feed_forward.1} parent=0 // pred_check
    %p265 = pneg %p264
  $region27: #{feed_forward.1} parent=0 // pred_check_branch
    %267 = sbr.rel (%p265) target = $region29
  $region28: #{feed_forward.1} parent=0 // pred_region
    %v268 = vld [vmem:[%s5] sm:$0xff]
    %v269 = vld [vmem:[%s5 + $0x8] sm:$0xff]
    %v270 = vadd.f32 %v268, %v243
    %v271 = vadd.f32 %v269, %v246
    %272 = vst [vmem:[%s5] sm:$0xff] %v270
    %273 = vst [vmem:[%s5 + $0x8] sm:$0xff] %v271
  $region29: #{feed_forward.1} parent=0 // pred_fallthru
    _
  // Predicated region
  $region30: #{feed_forward.1} parent=0 // pred_check
    _
  $region31: #{feed_forward.1} parent=0 // pred_check_branch
    %275 = sbr.rel (0) target = $region33
  $region32: #{feed_forward.1} parent=0 // pred_region
    _
  $region33: #{feed_forward.1} parent=0 // pred_fallthru
    _
  // Predicated region
  $region34: #{feed_forward.1} parent=0 // pred_check
    _
  $region35: #{feed_forward.1} parent=0 // pred_check_branch
    %277 = sbr.rel (0) target = $region37
  $region36: #{feed_forward.1} parent=0 // pred_region
    _
  $region37: #{feed_forward.1} parent=0 // pred_fallthru
    _

</llo_original>
